<compile_context>
chip_gen: v7x
topology: tpu7x:2x2x1
jax: 0.10.0
libtpu: 0.0.40
codegen_flags: <defaults>
</compile_context>

<pallas_src>
import jax
import jax.numpy as jnp
from jax.experimental import pallas as pl
from jax.experimental.pallas import tpu as pltpu

IN_DIM = 28 * 28
H1, H2, OUT_DIM = 64, 32, 10
EPS = 1e-5
PAD = 128        # lane padding for packed params and the output
NEG_BIG = -1e30  # "minus infinity" for masked softmax lanes (finite, exp -> 0)


def mlp_kernel(x_ref, w1_ref, w2_ref, w3_ref, p_ref, o_ref):
    # p_ref rows: [b1, g1, be1, b2, g2, be2, b3, g3, be3], each padded to 128 lanes.
    def block(h, w_ref, row, dout):
        # Linear: bf16 operands, f32 accumulate on the MXU.
        z = jnp.dot(h.astype(jnp.bfloat16), w_ref[...],
                    preferred_element_type=jnp.float32)
        z = z + p_ref[row:row + 1, :dout]              # bias (1, dout) broadcast
        z = jnp.maximum(z, 0.0)                        # ReLU
        # BatchNorm1d (training-mode batch stats) folded into one scale/shift.
        mu = jnp.mean(z, axis=0, keepdims=True)
        var = jnp.maximum(jnp.mean(z * z, axis=0, keepdims=True) - mu * mu, 0.0)
        scale = p_ref[row + 1:row + 2, :dout] * jax.lax.rsqrt(var + EPS)
        shift = p_ref[row + 2:row + 3, :dout] - mu * scale
        return z * scale + shift

    h = block(x_ref[...], w1_ref, 0, H1)
    h = block(h, w2_ref, 3, H2)
    # Layer 3: w3/b3/g3/be3 are zero-padded to 128 output lanes, so padded
    # columns come out exactly 0 here (gamma=0, beta=0).
    h = block(h, w3_ref, 6, PAD)

    # Softmax over the real 10 logits; padded lanes masked to NEG_BIG so
    # exp underflows to 0 and they do not perturb max/sum.  Output stays
    # full 128 lanes wide -> single unmasked store.
    lane = jax.lax.broadcasted_iota(jnp.int32, h.shape, 1)
    logits = jnp.where(lane < OUT_DIM, h, NEG_BIG)
    m = jnp.max(logits, axis=1, keepdims=True)
    e = jnp.exp(logits - m)
    o_ref[...] = e / jnp.sum(e, axis=1, keepdims=True)


def prepare_params(params):
    """One-time packing: bf16 weights (+ lane-padded w3) and a (9,128) f32 param array."""
    dims = [H1, H2, OUT_DIM]
    w1 = params[0][0].astype(jnp.bfloat16)
    w2 = params[1][0].astype(jnp.bfloat16)
    w3 = jnp.pad(params[2][0], ((0, 0), (0, PAD - OUT_DIM))).astype(jnp.bfloat16)
    rows = []
    for i, (_, b, g, be) in enumerate(params):
        n = PAD - dims[i]
        rows += [jnp.pad(b, (0, n)), jnp.pad(g, (0, n)), jnp.pad(be, (0, n))]
    p = jnp.stack(rows).astype(jnp.float32)             # (9, 128)
    return w1, w2, w3, p


def mlp_forward(x_nchw, prepared):
    w1, w2, w3, p = prepared
    B = x_nchw.shape[0]
    # torch.flatten(x, 1); bf16 input operand for the first matmul.
    x = x_nchw.reshape(B, -1).astype(jnp.bfloat16)

    vmem = pl.BlockSpec(memory_space=pltpu.MemorySpace.VMEM)
    out_padded = pl.pallas_call(
        mlp_kernel,
        out_shape=jax.ShapeDtypeStruct((B, PAD), jnp.float32),
        in_specs=[vmem] * 5,
        out_specs=vmem,
    )(x, w1, w2, w3, p)
    return out_padded[:, :OUT_DIM]


def init_params(key):
    dims = [(IN_DIM, H1), (H1, H2), (H2, OUT_DIM)]
    params = []
    for i, (din, dout) in enumerate(dims):
        kw, kb = jax.random.split(jax.random.fold_in(key, i))
        bound = 1.0 / (din ** 0.5)
        w = jax.random.uniform(kw, (din, dout), jnp.float32, -bound, bound)
        b = jax.random.uniform(kb, (dout,), jnp.float32, -bound, bound)
        gamma = jnp.ones((dout,), jnp.float32)
        beta = jnp.zeros((dout,), jnp.float32)
        params.append((w, b, gamma, beta))
    return params


if __name__ == "__main__":
    key = jax.random.PRNGKey(0)
    kx, kp = jax.random.split(key)
    x = jax.random.normal(kx, (8, 1, 28, 28), jnp.float32)  # NCHW like PyTorch
    params = init_params(kp)
    prepared = prepare_params(params)

    out = mlp_forward(x, prepared)
    out = jax.block_until_ready(out)

    assert out.shape == (8, OUT_DIM)
    assert bool(jnp.all(jnp.isfinite(out)))
    assert bool(jnp.all(out >= 0.0))
    # exact softmax normalization -> tight tolerance
    assert bool(jnp.allclose(jnp.sum(out, axis=1), 1.0, atol=1e-5))
    print("KERNEL_OK")
</pallas_src>

<mosaic_0001>
module attributes {stable_mosaic.version = 11 : i64} {
  func.func @mlp_kernel(%arg0: memref<8x784xbf16, #tpu.memory_space<vmem>>, %arg1: memref<784x64xbf16, #tpu.memory_space<vmem>>, %arg2: memref<64x32xbf16, #tpu.memory_space<vmem>>, %arg3: memref<32x128xbf16, #tpu.memory_space<vmem>>, %arg4: memref<9x128xf32, #tpu.memory_space<vmem>>, %arg5: memref<8x128xf32, #tpu.memory_space<vmem>>) attributes {dimension_semantics = [], scalar_prefetch = 0 : i64, scratch_operands = 0 : i64, tpu.core_type = #tpu.core_type<tc>} {
    %c0 = arith.constant 0 : index
    %c0_0 = arith.constant 0 : index
    %0 = vector.load %arg0[%c0, %c0_0] : memref<8x784xbf16, #tpu.memory_space<vmem>>, vector<8x784xbf16>
    %c0_1 = arith.constant 0 : index
    %c0_2 = arith.constant 0 : index
    %1 = vector.load %arg1[%c0_1, %c0_2] : memref<784x64xbf16, #tpu.memory_space<vmem>>, vector<784x64xbf16>
    %cst = arith.constant dense<0.000000e+00> : vector<8x64xf32>
    %2 = tpu.matmul %0, %1, %cst {dimension_numbers = #tpu.dot_dimension_numbers<[1], [0], [0], [1], [0, 0, 1, 1], [], []>} : vector<8x784xbf16>, vector<784x64xbf16>, vector<8x64xf32> -> vector<8x64xf32>
    %c0_3 = arith.constant 0 : index
    %c0_4 = arith.constant 0 : index
    %3 = vector.load %arg4[%c0_3, %c0_4] : memref<9x128xf32, #tpu.memory_space<vmem>>, vector<1x64xf32>
    %4 = vector.broadcast %3 : vector<1x64xf32> to vector<8x64xf32>
    %5 = arith.addf %2, %4 : vector<8x64xf32>
    %cst_5 = arith.constant 0.000000e+00 : f32
    %6 = vector.broadcast %cst_5 : f32 to vector<8x64xf32>
    %7 = arith.maximumf %5, %6 : vector<8x64xf32>
    %cst_6 = arith.constant dense<0.000000e+00> : vector<64xf32>
    %8 = vector.multi_reduction <add>, %7, %cst_6 [0] : vector<8x64xf32> to vector<64xf32>
    %9 = vector.shape_cast %8 : vector<64xf32> to vector<1x64xf32>
    %cst_7 = arith.constant 8.000000e+00 : f32
    %10 = vector.broadcast %cst_7 : f32 to vector<1x64xf32>
    %11 = arith.divf %9, %10 : vector<1x64xf32>
    %12 = arith.mulf %7, %7 : vector<8x64xf32>
    %cst_8 = arith.constant dense<0.000000e+00> : vector<64xf32>
    %13 = vector.multi_reduction <add>, %12, %cst_8 [0] : vector<8x64xf32> to vector<64xf32>
    %14 = vector.shape_cast %13 : vector<64xf32> to vector<1x64xf32>
    %cst_9 = arith.constant 8.000000e+00 : f32
    %15 = vector.broadcast %cst_9 : f32 to vector<1x64xf32>
    %16 = arith.divf %14, %15 : vector<1x64xf32>
    %17 = arith.mulf %11, %11 : vector<1x64xf32>
    %18 = arith.subf %16, %17 : vector<1x64xf32>
    %cst_10 = arith.constant 0.000000e+00 : f32
    %19 = vector.broadcast %cst_10 : f32 to vector<1x64xf32>
    %20 = arith.maximumf %18, %19 : vector<1x64xf32>
    %c1 = arith.constant 1 : index
    %c0_11 = arith.constant 0 : index
    %21 = vector.load %arg4[%c1, %c0_11] : memref<9x128xf32, #tpu.memory_space<vmem>>, vector<1x64xf32>
    %cst_12 = arith.constant 9.99999974E-6 : f32
    %22 = vector.broadcast %cst_12 : f32 to vector<1x64xf32>
    %23 = arith.addf %20, %22 : vector<1x64xf32>
    %24 = math.rsqrt %23 : vector<1x64xf32>
    %25 = arith.mulf %21, %24 : vector<1x64xf32>
    %c2 = arith.constant 2 : index
    %c0_13 = arith.constant 0 : index
    %26 = vector.load %arg4[%c2, %c0_13] : memref<9x128xf32, #tpu.memory_space<vmem>>, vector<1x64xf32>
    %27 = arith.mulf %11, %25 : vector<1x64xf32>
    %28 = arith.subf %26, %27 : vector<1x64xf32>
    %29 = vector.broadcast %25 : vector<1x64xf32> to vector<8x64xf32>
    %30 = arith.mulf %7, %29 : vector<8x64xf32>
    %31 = vector.broadcast %28 : vector<1x64xf32> to vector<8x64xf32>
    %32 = arith.addf %30, %31 : vector<8x64xf32>
    %33 = arith.truncf %32 : vector<8x64xf32> to vector<8x64xbf16>
    %c0_14 = arith.constant 0 : index
    %c0_15 = arith.constant 0 : index
    %34 = vector.load %arg2[%c0_14, %c0_15] : memref<64x32xbf16, #tpu.memory_space<vmem>>, vector<64x32xbf16>
    %cst_16 = arith.constant dense<0.000000e+00> : vector<8x32xf32>
    %35 = tpu.matmul %33, %34, %cst_16 {dimension_numbers = #tpu.dot_dimension_numbers<[1], [0], [0], [1], [0, 0, 1, 1], [], []>} : vector<8x64xbf16>, vector<64x32xbf16>, vector<8x32xf32> -> vector<8x32xf32>
    %c3 = arith.constant 3 : index
    %c0_17 = arith.constant 0 : index
    %36 = vector.load %arg4[%c3, %c0_17] : memref<9x128xf32, #tpu.memory_space<vmem>>, vector<1x32xf32>
    %37 = vector.broadcast %36 : vector<1x32xf32> to vector<8x32xf32>
    %38 = arith.addf %35, %37 : vector<8x32xf32>
    %cst_18 = arith.constant 0.000000e+00 : f32
    %39 = vector.broadcast %cst_18 : f32 to vector<8x32xf32>
    %40 = arith.maximumf %38, %39 : vector<8x32xf32>
    %cst_19 = arith.constant dense<0.000000e+00> : vector<32xf32>
    %41 = vector.multi_reduction <add>, %40, %cst_19 [0] : vector<8x32xf32> to vector<32xf32>
    %42 = vector.shape_cast %41 : vector<32xf32> to vector<1x32xf32>
    %cst_20 = arith.constant 8.000000e+00 : f32
    %43 = vector.broadcast %cst_20 : f32 to vector<1x32xf32>
    %44 = arith.divf %42, %43 : vector<1x32xf32>
    %45 = arith.mulf %40, %40 : vector<8x32xf32>
    %cst_21 = arith.constant dense<0.000000e+00> : vector<32xf32>
    %46 = vector.multi_reduction <add>, %45, %cst_21 [0] : vector<8x32xf32> to vector<32xf32>
    %47 = vector.shape_cast %46 : vector<32xf32> to vector<1x32xf32>
    %cst_22 = arith.constant 8.000000e+00 : f32
    %48 = vector.broadcast %cst_22 : f32 to vector<1x32xf32>
    %49 = arith.divf %47, %48 : vector<1x32xf32>
    %50 = arith.mulf %44, %44 : vector<1x32xf32>
    %51 = arith.subf %49, %50 : vector<1x32xf32>
    %cst_23 = arith.constant 0.000000e+00 : f32
    %52 = vector.broadcast %cst_23 : f32 to vector<1x32xf32>
    %53 = arith.maximumf %51, %52 : vector<1x32xf32>
    %c4 = arith.constant 4 : index
    %c0_24 = arith.constant 0 : index
    %54 = vector.load %arg4[%c4, %c0_24] : memref<9x128xf32, #tpu.memory_space<vmem>>, vector<1x32xf32>
    %cst_25 = arith.constant 9.99999974E-6 : f32
    %55 = vector.broadcast %cst_25 : f32 to vector<1x32xf32>
    %56 = arith.addf %53, %55 : vector<1x32xf32>
    %57 = math.rsqrt %56 : vector<1x32xf32>
    %58 = arith.mulf %54, %57 : vector<1x32xf32>
    %c5 = arith.constant 5 : index
    %c0_26 = arith.constant 0 : index
    %59 = vector.load %arg4[%c5, %c0_26] : memref<9x128xf32, #tpu.memory_space<vmem>>, vector<1x32xf32>
    %60 = arith.mulf %44, %58 : vector<1x32xf32>
    %61 = arith.subf %59, %60 : vector<1x32xf32>
    %62 = vector.broadcast %58 : vector<1x32xf32> to vector<8x32xf32>
    %63 = arith.mulf %40, %62 : vector<8x32xf32>
    %64 = vector.broadcast %61 : vector<1x32xf32> to vector<8x32xf32>
    %65 = arith.addf %63, %64 : vector<8x32xf32>
    %66 = arith.truncf %65 : vector<8x32xf32> to vector<8x32xbf16>
    %c0_27 = arith.constant 0 : index
    %c0_28 = arith.constant 0 : index
    %67 = vector.load %arg3[%c0_27, %c0_28] : memref<32x128xbf16, #tpu.memory_space<vmem>>, vector<32x128xbf16>
    %cst_29 = arith.constant dense<0.000000e+00> : vector<8x128xf32>
    %68 = tpu.matmul %66, %67, %cst_29 {dimension_numbers = #tpu.dot_dimension_numbers<[1], [0], [0], [1], [0, 0, 1, 1], [], []>} : vector<8x32xbf16>, vector<32x128xbf16>, vector<8x128xf32> -> vector<8x128xf32>
    %c6 = arith.constant 6 : index
    %c0_30 = arith.constant 0 : index
    %69 = vector.load %arg4[%c6, %c0_30] : memref<9x128xf32, #tpu.memory_space<vmem>>, vector<1x128xf32>
    %70 = vector.broadcast %69 : vector<1x128xf32> to vector<8x128xf32>
    %71 = arith.addf %68, %70 : vector<8x128xf32>
    %cst_31 = arith.constant 0.000000e+00 : f32
    %72 = vector.broadcast %cst_31 : f32 to vector<8x128xf32>
    %73 = arith.maximumf %71, %72 : vector<8x128xf32>
    %cst_32 = arith.constant dense<0.000000e+00> : vector<128xf32>
    %74 = vector.multi_reduction <add>, %73, %cst_32 [0] : vector<8x128xf32> to vector<128xf32>
    %75 = vector.shape_cast %74 : vector<128xf32> to vector<1x128xf32>
    %cst_33 = arith.constant 8.000000e+00 : f32
    %76 = vector.broadcast %cst_33 : f32 to vector<1x128xf32>
    %77 = arith.divf %75, %76 : vector<1x128xf32>
    %78 = arith.mulf %73, %73 : vector<8x128xf32>
    %cst_34 = arith.constant dense<0.000000e+00> : vector<128xf32>
    %79 = vector.multi_reduction <add>, %78, %cst_34 [0] : vector<8x128xf32> to vector<128xf32>
    %80 = vector.shape_cast %79 : vector<128xf32> to vector<1x128xf32>
    %cst_35 = arith.constant 8.000000e+00 : f32
    %81 = vector.broadcast %cst_35 : f32 to vector<1x128xf32>
    %82 = arith.divf %80, %81 : vector<1x128xf32>
    %83 = arith.mulf %77, %77 : vector<1x128xf32>
    %84 = arith.subf %82, %83 : vector<1x128xf32>
    %cst_36 = arith.constant 0.000000e+00 : f32
    %85 = vector.broadcast %cst_36 : f32 to vector<1x128xf32>
    %86 = arith.maximumf %84, %85 : vector<1x128xf32>
    %c7 = arith.constant 7 : index
    %c0_37 = arith.constant 0 : index
    %87 = vector.load %arg4[%c7, %c0_37] : memref<9x128xf32, #tpu.memory_space<vmem>>, vector<1x128xf32>
    %cst_38 = arith.constant 9.99999974E-6 : f32
    %88 = vector.broadcast %cst_38 : f32 to vector<1x128xf32>
    %89 = arith.addf %86, %88 : vector<1x128xf32>
    %90 = math.rsqrt %89 : vector<1x128xf32>
    %91 = arith.mulf %87, %90 : vector<1x128xf32>
    %c8 = arith.constant 8 : index
    %c0_39 = arith.constant 0 : index
    %92 = vector.load %arg4[%c8, %c0_39] : memref<9x128xf32, #tpu.memory_space<vmem>>, vector<1x128xf32>
    %93 = arith.mulf %77, %91 : vector<1x128xf32>
    %94 = arith.subf %92, %93 : vector<1x128xf32>
    %95 = vector.broadcast %91 : vector<1x128xf32> to vector<8x128xf32>
    %96 = arith.mulf %73, %95 : vector<8x128xf32>
    %97 = vector.broadcast %94 : vector<1x128xf32> to vector<8x128xf32>
    %98 = arith.addf %96, %97 : vector<8x128xf32>
    %99 = tpu.iota {dimensions = array<i32: 1>} : vector<8x128xi32>
    %c10_i32 = arith.constant 10 : i32
    %100 = vector.broadcast %c10_i32 : i32 to vector<8x128xi32>
    %101 = arith.cmpi slt, %99, %100 : vector<8x128xi32>
    %cst_40 = arith.constant -1.000000e+30 : f32
    %102 = vector.broadcast %cst_40 : f32 to vector<8x128xf32>
    %103 = arith.select %101, %98, %102 : vector<8x128xi1>, vector<8x128xf32>
    %cst_41 = arith.constant dense<0xFF800000> : vector<8xf32>
    %104 = vector.multi_reduction <maximumf>, %103, %cst_41 [1] : vector<8x128xf32> to vector<8xf32>
    %105 = vector.shape_cast %104 : vector<8xf32> to vector<8x1xf32>
    %106 = vector.broadcast %105 : vector<8x1xf32> to vector<8x128xf32>
    %107 = arith.subf %103, %106 : vector<8x128xf32>
    %108 = math.exp %107 : vector<8x128xf32>
    %cst_42 = arith.constant dense<0.000000e+00> : vector<8xf32>
    %109 = vector.multi_reduction <add>, %108, %cst_42 [1] : vector<8x128xf32> to vector<8xf32>
    %110 = vector.shape_cast %109 : vector<8xf32> to vector<8x1xf32>
    %111 = vector.broadcast %110 : vector<8x1xf32> to vector<8x128xf32>
    %112 = arith.divf %108, %111 : vector<8x128xf32>
    %c0_43 = arith.constant 0 : index
    %c0_44 = arith.constant 0 : index
    %113 = vector.load %arg5[%c0_43, %c0_44] : memref<8x128xf32, #tpu.memory_space<vmem>>, vector<8x128xf32>
    tpu.vector_store %arg5[%c0_43, %c0_44], %112 {strides = array<i32>} : memref<8x128xf32, #tpu.memory_space<vmem>>, vector<8x128xf32>,
    return
  }
}

</mosaic_0001>

<llo_original>
// kernel: tpu_custom_call.1
$region0: #{tpu_custom_call.1}
  #allocation0 [shape = 'u32[]', space=smem, size = 0x4, offset = 0x4, fixed_abs, tag = 'smem constant byte address 0x4 - core index']
  #allocation1 [shape = 'u32[144,128]{1,0:T(1,128)}', space=vmem, size = 0x12000, scoped, tag = 'internal scratch']
  %s0 = inlined_call_operand.vmem [shape: bf16[8,784], index: 0, kind: input, shape index: {}]
  %s1 = inlined_call_operand.vmem [shape: bf16[784,64], index: 1, kind: input, shape index: {}]
  %s2 = inlined_call_operand.vmem [shape: bf16[64,32], index: 2, kind: input, shape index: {}]
  %s3 = inlined_call_operand.vmem [shape: bf16[32,128], index: 3, kind: input, shape index: {}]
  %s4 = inlined_call_operand.vmem [shape: f32[9,128], index: 4, kind: input, shape index: {}]
  %s5 = inlined_call_operand.hbm [shape: f32[8,128], index: 5, kind: output, shape index: {}]
  %s6 = sld [smem:[#allocation0]]
  $region30: #{tpu_custom_call.1} parent=0
    _
  %s8 = ssub.s32 1, %s6
  %s9 = scalar_select 0, %s8, %s6
  $region1: #{tpu_custom_call.1} parent=0
    #allocation2 [shape = 'u8[4096]{0}', space=vmem, size = 0x1000, scoped, tag = 'output window, operand 0, single buffered']
    #allocation3 [shape = 's32[1]{0}', space=sflag, size = 0x4, scoped, tag = 'scoped memory for tpu_custom_call.1']
    %10 = vsyncpa [#allocation3], 0
    // Predicated region
    $region2: #{tpu_custom_call.1} parent=1 // pred_check
      _
    $region3: #{tpu_custom_call.1} parent=1 // pred_check_branch
      %12 = sbr.rel (0) target = $region5
    $region4: #{tpu_custom_call.1} parent=1 // pred_region
      _
    $region5: #{tpu_custom_call.1} parent=1 // pred_fallthru
      _
    // Predicated region
    $region6: #{tpu_custom_call.1} parent=1 // pred_check
      _
    $region7: #{tpu_custom_call.1} parent=1 // pred_check_branch
      %14 = sbr.rel (0) target = $region9
    $region8: #{tpu_custom_call.1} parent=1 // pred_region
      _
    $region9: #{tpu_custom_call.1} parent=1 // pred_fallthru
      _
    // Predicated region
    $region10: #{tpu_custom_call.1} parent=1 // pred_check
      _
    $region11: #{tpu_custom_call.1} parent=1 // pred_check_branch
      %16 = sbr.rel (0) target = $region13
    $region12: #{tpu_custom_call.1} parent=1 // pred_region
      _
    $region13: #{tpu_custom_call.1} parent=1 // pred_fallthru
      _
    // Predicated region
    $region14: #{tpu_custom_call.1} parent=1 // pred_check
      _
    $region15: #{tpu_custom_call.1} parent=1 // pred_check_branch
      %18 = sbr.rel (0) target = $region17
    $region16: #{tpu_custom_call.1} parent=1 // pred_region
      _
    $region17: #{tpu_custom_call.1} parent=1 // pred_fallthru
      _
    // Predicated region
    $region18: #{tpu_custom_call.1} parent=1 // pred_check
      _
    $region19: #{tpu_custom_call.1} parent=1 // pred_check_branch
      %20 = sbr.rel (0) target = $region21
    $region20: #{tpu_custom_call.1} parent=1 // pred_region
      _
    $region21: #{tpu_custom_call.1} parent=1 // pred_fallthru
      _
    %v22 = vld [vmem:[%s0] sm:$0xff]
    %v23 = vld [vmem:[%s0 + $0x8] sm:$0xff]
    %v24 = vld [vmem:[%s0 + $0x10] sm:$0xff]
    %v25 = vld [vmem:[%s0 + $0x18] sm:$0xf]
    %v26 = vld [vmem:[%s1] sm:$0xf]
    %v27 = vld [vmem:[%s1 + $0x4] sm:$0xf]
    %v28 = vld [vmem:[%s1 + $0x8] sm:$0xf]
    %v29 = vld [vmem:[%s1 + $0xc] sm:$0xf]
    %v30 = vld [vmem:[%s1 + $0x10] sm:$0xf]
    %v31 = vld [vmem:[%s1 + $0x14] sm:$0xf]
    %v32 = vld [vmem:[%s1 + $0x18] sm:$0xf]
    %v33 = vld [vmem:[%s1 + $0x1c] sm:$0xf]
    %v34 = vld [vmem:[%s1 + $0x20] sm:$0xf]
    %v35 = vld [vmem:[%s1 + $0x24] sm:$0xf]
    %v36 = vld [vmem:[%s1 + $0x28] sm:$0xf]
    %v37 = vld [vmem:[%s1 + $0x2c] sm:$0xf]
    %v38 = vld [vmem:[%s1 + $0x30] sm:$0xf]
    %v39 = vld [vmem:[%s1 + $0x34] sm:$0xf]
    %v40 = vld [vmem:[%s1 + $0x38] sm:$0xf]
    %v41 = vld [vmem:[%s1 + $0x3c] sm:$0xf]
    %v42 = vld [vmem:[%s1 + $0x40] sm:$0xf]
    %v43 = vld [vmem:[%s1 + $0x44] sm:$0xf]
    %v44 = vld [vmem:[%s1 + $0x48] sm:$0xf]
    %v45 = vld [vmem:[%s1 + $0x4c] sm:$0xf]
    %v46 = vld [vmem:[%s1 + $0x50] sm:$0xf]
    %v47 = vld [vmem:[%s1 + $0x54] sm:$0xf]
    %v48 = vld [vmem:[%s1 + $0x58] sm:$0xf]
    %v49 = vld [vmem:[%s1 + $0x5c] sm:$0xf]
    %v50 = vld [vmem:[%s1 + $0x60] sm:$0xf]
    %v51 = vld [vmem:[%s1 + $0x64] sm:$0xf]
    %v52 = vld [vmem:[%s1 + $0x68] sm:$0xf]
    %v53 = vld [vmem:[%s1 + $0x6c] sm:$0xf]
    %v54 = vld [vmem:[%s1 + $0x70] sm:$0xf]
    %v55 = vld [vmem:[%s1 + $0x74] sm:$0xf]
    %v56 = vld [vmem:[%s1 + $0x78] sm:$0xf]
    %v57 = vld [vmem:[%s1 + $0x7c] sm:$0xf]
    %v58 = vld [vmem:[%s1 + $0x80] sm:$0xf]
    %v59 = vld [vmem:[%s1 + $0x84] sm:$0xf]
    %v60 = vld [vmem:[%s1 + $0x88] sm:$0xf]
    %v61 = vld [vmem:[%s1 + $0x8c] sm:$0xf]
    %v62 = vld [vmem:[%s1 + $0x90] sm:$0xf]
    %v63 = vld [vmem:[%s1 + $0x94] sm:$0xf]
    %v64 = vld [vmem:[%s1 + $0x98] sm:$0xf]
    %v65 = vld [vmem:[%s1 + $0x9c] sm:$0xf]
    %v66 = vld [vmem:[%s1 + $0xa0] sm:$0xf]
    %v67 = vld [vmem:[%s1 + $0xa4] sm:$0xf]
    %v68 = vld [vmem:[%s1 + $0xa8] sm:$0xf]
    %v69 = vld [vmem:[%s1 + $0xac] sm:$0xf]
    %v70 = vld [vmem:[%s1 + $0xb0] sm:$0xf]
    %v71 = vld [vmem:[%s1 + $0xb4] sm:$0xf]
    %v72 = vld [vmem:[%s1 + $0xb8] sm:$0xf]
    %v73 = vld [vmem:[%s1 + $0xbc] sm:$0xf]
    %v74 = vld [vmem:[%s1 + $0xc0] sm:$0xf]
    %v75 = vld [vmem:[%s1 + $0xc4] sm:$0xf]
    %v76 = vld [vmem:[%s1 + $0xc8] sm:$0xf]
    %v77 = vld [vmem:[%s1 + $0xcc] sm:$0xf]
    %v78 = vld [vmem:[%s1 + $0xd0] sm:$0xf]
    %v79 = vld [vmem:[%s1 + $0xd4] sm:$0xf]
    %v80 = vld [vmem:[%s1 + $0xd8] sm:$0xf]
    %v81 = vld [vmem:[%s1 + $0xdc] sm:$0xf]
    %v82 = vld [vmem:[%s1 + $0xe0] sm:$0xf]
    %v83 = vld [vmem:[%s1 + $0xe4] sm:$0xf]
    %v84 = vld [vmem:[%s1 + $0xe8] sm:$0xf]
    %v85 = vld [vmem:[%s1 + $0xec] sm:$0xf]
    %v86 = vld [vmem:[%s1 + $0xf0] sm:$0xf]
    %v87 = vld [vmem:[%s1 + $0xf4] sm:$0xf]
    %v88 = vld [vmem:[%s1 + $0xf8] sm:$0xf]
    %v89 = vld [vmem:[%s1 + $0xfc] sm:$0xf]
    %v90 = vld [vmem:[%s1 + $0x100] sm:$0xf]
    %v91 = vld [vmem:[%s1 + $0x104] sm:$0xf]
    %v92 = vld [vmem:[%s1 + $0x108] sm:$0xf]
    %v93 = vld [vmem:[%s1 + $0x10c] sm:$0xf]
    %v94 = vld [vmem:[%s1 + $0x110] sm:$0xf]
    %v95 = vld [vmem:[%s1 + $0x114] sm:$0xf]
    %v96 = vld [vmem:[%s1 + $0x118] sm:$0xf]
    %v97 = vld [vmem:[%s1 + $0x11c] sm:$0xf]
    %v98 = vld [vmem:[%s1 + $0x120] sm:$0xf]
    %v99 = vld [vmem:[%s1 + $0x124] sm:$0xf]
    %v100 = vld [vmem:[%s1 + $0x128] sm:$0xf]
    %v101 = vld [vmem:[%s1 + $0x12c] sm:$0xf]
    %v102 = vld [vmem:[%s1 + $0x130] sm:$0xf]
    %v103 = vld [vmem:[%s1 + $0x134] sm:$0xf]
    %v104 = vld [vmem:[%s1 + $0x138] sm:$0xf]
    %v105 = vld [vmem:[%s1 + $0x13c] sm:$0xf]
    %v106 = vld [vmem:[%s1 + $0x140] sm:$0xf]
    %v107 = vld [vmem:[%s1 + $0x144] sm:$0xf]
    %v108 = vld [vmem:[%s1 + $0x148] sm:$0xf]
    %v109 = vld [vmem:[%s1 + $0x14c] sm:$0xf]
    %v110 = vld [vmem:[%s1 + $0x150] sm:$0xf]
    %v111 = vld [vmem:[%s1 + $0x154] sm:$0xf]
    %v112 = vld [vmem:[%s1 + $0x158] sm:$0xf]
    %v113 = vld [vmem:[%s1 + $0x15c] sm:$0xf]
    %v114 = vld [vmem:[%s1 + $0x160] sm:$0xf]
    %v115 = vld [vmem:[%s1 + $0x164] sm:$0xf]
    %v116 = vld [vmem:[%s1 + $0x168] sm:$0xf]
    %v117 = vld [vmem:[%s1 + $0x16c] sm:$0xf]
    %v118 = vld [vmem:[%s1 + $0x170] sm:$0xf]
    %v119 = vld [vmem:[%s1 + $0x174] sm:$0xf]
    %v120 = vld [vmem:[%s1 + $0x178] sm:$0xf]
    %v121 = vld [vmem:[%s1 + $0x17c] sm:$0xf]
    %v122 = vld [vmem:[%s1 + $0x180] sm:$0xf]
    %v123 = vld [vmem:[%s1 + $0x184] sm:$0xf]
    %v124 = vld [vmem:[%s4] sm:$0x1]
    %v125 = vlaneseq
    %v126 = vshrl.u32 %v125, 7
    %v127 = vsub.s32 0, %v126
    %v128 = vrot.slane %v124, %v127
    %v133 = vunpack.c.l.b16 %v22
    %v134 = vunpack.c.h.b16 %v22
    %v135 = vunpack.c.l.b16 %v23
    %v136 = vunpack.c.h.b16 %v23
    %v137 = vunpack.c.l.b16 %v24
    %v138 = vunpack.c.h.b16 %v24
    %v139 = vunpack.c.l.b16 %v25
    %v140 = vpack.c.b16 %v133, %v133
    %v141 = vpack.c.b16 %v134, %v134
    %v142 = vpack.c.b16 %v135, %v135
    %v143 = vpack.c.b16 %v136, %v136
    %v144 = vpack.c.b16 %v137, %v137
    %v145 = vpack.c.b16 %v138, %v138
    %v146 = vpack.c.b16 %v139, %v139
    %v251 = vunpack.c.l.b16 %v26
    %v252 = vunpack.c.l.b16 %v27
    %v253 = vunpack.c.l.b16 %v28
    %v254 = vunpack.c.l.b16 %v29
    %v255 = vunpack.c.l.b16 %v30
    %v256 = vunpack.c.l.b16 %v31
    %v257 = vunpack.c.l.b16 %v32
    %v258 = vunpack.c.l.b16 %v33
    %v259 = vunpack.c.l.b16 %v34
    %v260 = vunpack.c.l.b16 %v35
    %v261 = vunpack.c.l.b16 %v36
    %v262 = vunpack.c.l.b16 %v37
    %v263 = vunpack.c.l.b16 %v38
    %v264 = vunpack.c.l.b16 %v39
    %v265 = vunpack.c.l.b16 %v40
    %v266 = vunpack.c.l.b16 %v41
    %v267 = vunpack.c.l.b16 %v42
    %v268 = vunpack.c.l.b16 %v43
    %v269 = vunpack.c.l.b16 %v44
    %v270 = vunpack.c.l.b16 %v45
    %v271 = vunpack.c.l.b16 %v46
    %v272 = vunpack.c.l.b16 %v47
    %v273 = vunpack.c.l.b16 %v48
    %v274 = vunpack.c.l.b16 %v49
    %v275 = vunpack.c.l.b16 %v50
    %v276 = vunpack.c.l.b16 %v51
    %v277 = vunpack.c.l.b16 %v52
    %v278 = vunpack.c.l.b16 %v53
    %v279 = vunpack.c.l.b16 %v54
    %v280 = vunpack.c.l.b16 %v55
    %v281 = vunpack.c.l.b16 %v56
    %v282 = vunpack.c.l.b16 %v57
    %v283 = vunpack.c.l.b16 %v58
    %v284 = vunpack.c.l.b16 %v59
    %v285 = vunpack.c.l.b16 %v60
    %v286 = vunpack.c.l.b16 %v61
    %v287 = vunpack.c.l.b16 %v62
    %v288 = vunpack.c.l.b16 %v63
    %v289 = vunpack.c.l.b16 %v64
    %v290 = vunpack.c.l.b16 %v65
    %v291 = vunpack.c.l.b16 %v66
    %v292 = vunpack.c.l.b16 %v67
    %v293 = vunpack.c.l.b16 %v68
    %v294 = vunpack.c.l.b16 %v69
    %v295 = vunpack.c.l.b16 %v70
    %v296 = vunpack.c.l.b16 %v71
    %v297 = vunpack.c.l.b16 %v72
    %v298 = vunpack.c.l.b16 %v73
    %v299 = vunpack.c.l.b16 %v74
    %v300 = vunpack.c.l.b16 %v75
    %v301 = vunpack.c.l.b16 %v76
    %v302 = vunpack.c.l.b16 %v77
    %v303 = vunpack.c.l.b16 %v78
    %v304 = vunpack.c.l.b16 %v79
    %v305 = vunpack.c.l.b16 %v80
    %v306 = vunpack.c.l.b16 %v81
    %v307 = vunpack.c.l.b16 %v82
    %v308 = vunpack.c.l.b16 %v83
    %v309 = vunpack.c.l.b16 %v84
    %v310 = vunpack.c.l.b16 %v85
    %v311 = vunpack.c.l.b16 %v86
    %v312 = vunpack.c.l.b16 %v87
    %v313 = vunpack.c.l.b16 %v88
    %v314 = vunpack.c.l.b16 %v89
    %v315 = vunpack.c.l.b16 %v90
    %v316 = vunpack.c.l.b16 %v91
    %v317 = vunpack.c.l.b16 %v92
    %v318 = vunpack.c.l.b16 %v93
    %v319 = vunpack.c.l.b16 %v94
    %v320 = vunpack.c.l.b16 %v95
    %v321 = vunpack.c.l.b16 %v96
    %v322 = vunpack.c.l.b16 %v97
    %v323 = vunpack.c.l.b16 %v98
    %v324 = vunpack.c.l.b16 %v99
    %v325 = vunpack.c.l.b16 %v100
    %v326 = vunpack.c.l.b16 %v101
    %v327 = vunpack.c.l.b16 %v102
    %v328 = vunpack.c.l.b16 %v103
    %v329 = vunpack.c.l.b16 %v104
    %v330 = vunpack.c.l.b16 %v105
    %v331 = vunpack.c.l.b16 %v106
    %v332 = vunpack.c.l.b16 %v107
    %v333 = vunpack.c.l.b16 %v108
    %v334 = vunpack.c.l.b16 %v109
    %v335 = vunpack.c.l.b16 %v110
    %v336 = vunpack.c.l.b16 %v111
    %v337 = vunpack.c.l.b16 %v112
    %v338 = vunpack.c.l.b16 %v113
    %v339 = vunpack.c.l.b16 %v114
    %v340 = vunpack.c.l.b16 %v115
    %v341 = vunpack.c.l.b16 %v116
    %v342 = vunpack.c.l.b16 %v117
    %v343 = vunpack.c.l.b16 %v118
    %v344 = vunpack.c.l.b16 %v119
    %v345 = vunpack.c.l.b16 %v120
    %v346 = vunpack.c.l.b16 %v121
    %v347 = vunpack.c.l.b16 %v122
    %v348 = vunpack.c.l.b16 %v123
    %v349 = vpack.c.b16 %v252, %v251
    %v350 = vpack.c.b16 %v254, %v253
    %v351 = vpack.c.b16 %v256, %v255
    %v352 = vpack.c.b16 %v258, %v257
    %v353 = vpack.c.b16 %v260, %v259
    %v354 = vpack.c.b16 %v262, %v261
    %v355 = vpack.c.b16 %v264, %v263
    %v356 = vpack.c.b16 %v266, %v265
    %v357 = vpack.c.b16 %v268, %v267
    %v358 = vpack.c.b16 %v270, %v269
    %v359 = vpack.c.b16 %v272, %v271
    %v360 = vpack.c.b16 %v274, %v273
    %v361 = vpack.c.b16 %v276, %v275
    %v362 = vpack.c.b16 %v278, %v277
    %v363 = vpack.c.b16 %v280, %v279
    %v364 = vpack.c.b16 %v282, %v281
    %v365 = vpack.c.b16 %v284, %v283
    %v366 = vpack.c.b16 %v286, %v285
    %v367 = vpack.c.b16 %v288, %v287
    %v368 = vpack.c.b16 %v290, %v289
    %v369 = vpack.c.b16 %v292, %v291
    %v370 = vpack.c.b16 %v294, %v293
    %v371 = vpack.c.b16 %v296, %v295
    %v372 = vpack.c.b16 %v298, %v297
    %v373 = vpack.c.b16 %v300, %v299
    %v374 = vpack.c.b16 %v302, %v301
    %v375 = vpack.c.b16 %v304, %v303
    %v376 = vpack.c.b16 %v306, %v305
    %v377 = vpack.c.b16 %v308, %v307
    %v378 = vpack.c.b16 %v310, %v309
    %v379 = vpack.c.b16 %v312, %v311
    %v380 = vpack.c.b16 %v314, %v313
    %v381 = vpack.c.b16 %v316, %v315
    %v382 = vpack.c.b16 %v318, %v317
    %v383 = vpack.c.b16 %v320, %v319
    %v384 = vpack.c.b16 %v322, %v321
    %v385 = vpack.c.b16 %v324, %v323
    %v386 = vpack.c.b16 %v326, %v325
    %v387 = vpack.c.b16 %v328, %v327
    %v388 = vpack.c.b16 %v330, %v329
    %v389 = vpack.c.b16 %v332, %v331
    %v390 = vpack.c.b16 %v334, %v333
    %v391 = vpack.c.b16 %v336, %v335
    %v392 = vpack.c.b16 %v338, %v337
    %v393 = vpack.c.b16 %v340, %v339
    %v394 = vpack.c.b16 %v342, %v341
    %v395 = vpack.c.b16 %v344, %v343
    %v396 = vpack.c.b16 %v346, %v345
    %v397 = vpack.c.b16 %v348, %v347
    %vm447 = vcmask 130048
    %v449 = vsel %vm447, %v146, 0
    %451 = vmatprep.subr.bf16.mxu0 0
    %452 = vmatpush1.bf16.msra.mxu0 %v349
    %453 = vmatprep.subr.bf16.mxu0 0
    %454 = vmatpush1.bf16.msra.mxu0 %v350
    %455 = vmatprep.subr.bf16.mxu0 0
    %456 = vmatpush1.bf16.msra.mxu0 %v351
    %457 = vmatprep.subr.bf16.mxu0 0
    %458 = vmatpush1.bf16.msra.mxu0 %v352
    %459 = vmatprep.subr.bf16.mxu0 0
    %460 = vmatpush1.bf16.msra.mxu0 %v353
    %461 = vmatprep.subr.bf16.mxu0 0
    %462 = vmatpush1.bf16.msra.mxu0 %v354
    %463 = vmatprep.subr.bf16.mxu0 0
    %464 = vmatpush1.bf16.msra.mxu0 %v355
    %465 = vmatprep.subr.bf16.mxu0 0
    %466 = vmatpush1.bf16.msra.mxu0 %v356
    %467 = vmatprep.subr.bf16.mxu0 0
    %468 = vmatpush1.bf16.msra.mxu0 %v357
    %469 = vmatprep.subr.bf16.mxu0 0
    %470 = vmatpush1.bf16.msra.mxu0 %v358
    %471 = vmatprep.subr.bf16.mxu0 0
    %472 = vmatpush1.bf16.msra.mxu0 %v359
    %473 = vmatprep.subr.bf16.mxu0 0
    %474 = vmatpush1.bf16.msra.mxu0 %v360
    %475 = vmatprep.subr.bf16.mxu0 0
    %476 = vmatpush1.bf16.msra.mxu0 %v361
    %477 = vmatprep.subr.bf16.mxu0 0
    %478 = vmatpush1.bf16.msra.mxu0 %v362
    %479 = vmatprep.subr.bf16.mxu0 0
    %480 = vmatpush1.bf16.msra.mxu0 %v363
    %481 = vmatprep.subr.bf16.mxu0 0
    %482 = vmatpush1.bf16.msra.mxu0 %v364
    %483 = vmatprep.mubr.bf16.mxu0 %v141
    %484 = vmatmul.mubr.bf16.gmra.mrb[0].mxu0 %v140
    %v485 = vpop.f32.mrb[0].mxu0
    %v486 = vadd.f32 %v128, %v485
    %v487 = vpop.f32.mrb[0].mxu0
    %v488 = vpop.f32.mrb[0].mxu0
    %v489 = vpop.f32.mrb[0].mxu0
    %490 = vdwg.mxu0
    %491 = vmatprep.subr.bf16.mxu0 0
    %492 = vmatpush1.bf16.msra.mxu0 %v365
    %493 = vmatprep.subr.bf16.mxu0 0
    %494 = vmatpush1.bf16.msra.mxu0 %v366
    %495 = vmatprep.subr.bf16.mxu0 0
    %496 = vmatpush1.bf16.msra.mxu0 %v367
    %497 = vmatprep.subr.bf16.mxu0 0
    %498 = vmatpush1.bf16.msra.mxu0 %v368
    %499 = vmatprep.subr.bf16.mxu0 0
    %500 = vmatpush1.bf16.msra.mxu0 %v369
    %501 = vmatprep.subr.bf16.mxu0 0
    %502 = vmatpush1.bf16.msra.mxu0 %v370
    %503 = vmatprep.subr.bf16.mxu0 0
    %504 = vmatpush1.bf16.msra.mxu0 %v371
    %505 = vmatprep.subr.bf16.mxu0 0
    %506 = vmatpush1.bf16.msra.mxu0 %v372
    %507 = vmatprep.subr.bf16.mxu0 0
    %508 = vmatpush1.bf16.msra.mxu0 %v373
    %509 = vmatprep.subr.bf16.mxu0 0
    %510 = vmatpush1.bf16.msra.mxu0 %v374
    %511 = vmatprep.subr.bf16.mxu0 0
    %512 = vmatpush1.bf16.msra.mxu0 %v375
    %513 = vmatprep.subr.bf16.mxu0 0
    %514 = vmatpush1.bf16.msra.mxu0 %v376
    %515 = vmatprep.subr.bf16.mxu0 0
    %516 = vmatpush1.bf16.msra.mxu0 %v377
    %517 = vmatprep.subr.bf16.mxu0 0
    %518 = vmatpush1.bf16.msra.mxu0 %v378
    %519 = vmatprep.subr.bf16.mxu0 0
    %520 = vmatpush1.bf16.msra.mxu0 %v379
    %521 = vmatprep.subr.bf16.mxu0 0
    %522 = vmatpush1.bf16.msra.mxu0 %v380
    %523 = vmatprep.mubr.bf16.mxu0 %v143
    %524 = vmatmul.mubr.bf16.gmra.mrb[0].mxu0 %v142
    %v525 = vpop.f32.mrb[0].mxu0
    %v526 = vadd.f32 %v486, %v525
    %v527 = vpop.f32.mrb[0].mxu0
    %v528 = vpop.f32.mrb[0].mxu0
    %v529 = vpop.f32.mrb[0].mxu0
    %530 = vdwg.mxu0
    %531 = vmatprep.subr.bf16.mxu0 0
    %532 = vmatpush1.bf16.msra.mxu0 %v381
    %533 = vmatprep.subr.bf16.mxu0 0
    %534 = vmatpush1.bf16.msra.mxu0 %v382
    %535 = vmatprep.subr.bf16.mxu0 0
    %536 = vmatpush1.bf16.msra.mxu0 %v383
    %537 = vmatprep.subr.bf16.mxu0 0
    %538 = vmatpush1.bf16.msra.mxu0 %v384
    %539 = vmatprep.subr.bf16.mxu0 0
    %540 = vmatpush1.bf16.msra.mxu0 %v385
    %541 = vmatprep.subr.bf16.mxu0 0
    %542 = vmatpush1.bf16.msra.mxu0 %v386
    %543 = vmatprep.subr.bf16.mxu0 0
    %544 = vmatpush1.bf16.msra.mxu0 %v387
    %545 = vmatprep.subr.bf16.mxu0 0
    %546 = vmatpush1.bf16.msra.mxu0 %v388
    %547 = vmatprep.subr.bf16.mxu0 0
    %548 = vmatpush1.bf16.msra.mxu0 %v389
    %549 = vmatprep.subr.bf16.mxu0 0
    %550 = vmatpush1.bf16.msra.mxu0 %v390
    %551 = vmatprep.subr.bf16.mxu0 0
    %552 = vmatpush1.bf16.msra.mxu0 %v391
    %553 = vmatprep.subr.bf16.mxu0 0
    %554 = vmatpush1.bf16.msra.mxu0 %v392
    %555 = vmatprep.subr.bf16.mxu0 0
    %556 = vmatpush1.bf16.msra.mxu0 %v393
    %557 = vmatprep.subr.bf16.mxu0 0
    %558 = vmatpush1.bf16.msra.mxu0 %v394
    %559 = vmatprep.subr.bf16.mxu0 0
    %560 = vmatpush1.bf16.msra.mxu0 %v395
    %561 = vmatprep.subr.bf16.mxu0 0
    %562 = vmatpush1.bf16.msra.mxu0 %v396
    %563 = vmatprep.mubr.bf16.mxu0 %v145
    %564 = vmatmul.mubr.bf16.gmra.mrb[0].mxu0 %v144
    %v565 = vpop.f32.mrb[0].mxu0
    %v566 = vadd.f32 %v526, %v565
    %v567 = vpop.f32.mrb[0].mxu0
    %v568 = vpop.f32.mrb[0].mxu0
    %v569 = vpop.f32.mrb[0].mxu0
    %570 = vdwg.mxu0
    %571 = vmatprep.subr.bf16.mxu0 0
    %572 = vmatpush1.bf16.msra.mxu0 %v397
    %573 = vmatprep.subr.bf16.mxu0 0
    %574 = vmatpush1.bf16.msra.mxu0 0
    %575 = vmatprep.subr.bf16.mxu0 0
    %576 = vmatpush1.bf16.msra.mxu0 0
    %577 = vmatprep.subr.bf16.mxu0 0
    %578 = vmatpush1.bf16.msra.mxu0 0
    %579 = vmatprep.subr.bf16.mxu0 0
    %580 = vmatpush1.bf16.msra.mxu0 0
    %581 = vmatprep.subr.bf16.mxu0 0
    %582 = vmatpush1.bf16.msra.mxu0 0
    %583 = vmatprep.subr.bf16.mxu0 0
    %584 = vmatpush1.bf16.msra.mxu0 0
    %585 = vmatprep.subr.bf16.mxu0 0
    %586 = vmatpush1.bf16.msra.mxu0 0
    %587 = vmatprep.subr.bf16.mxu0 0
    %588 = vmatpush1.bf16.msra.mxu0 0
    %589 = vmatprep.subr.bf16.mxu0 0
    %590 = vmatpush1.bf16.msra.mxu0 0
    %591 = vmatprep.subr.bf16.mxu0 0
    %592 = vmatpush1.bf16.msra.mxu0 0
    %593 = vmatprep.subr.bf16.mxu0 0
    %594 = vmatpush1.bf16.msra.mxu0 0
    %595 = vmatprep.subr.bf16.mxu0 0
    %596 = vmatpush1.bf16.msra.mxu0 0
    %597 = vmatprep.subr.bf16.mxu0 0
    %598 = vmatpush1.bf16.msra.mxu0 0
    %599 = vmatprep.subr.bf16.mxu0 0
    %600 = vmatpush1.bf16.msra.mxu0 0
    %601 = vmatprep.subr.bf16.mxu0 0
    %602 = vmatpush1.bf16.msra.mxu0 0
    %603 = vmatprep.mubr.bf16.mxu0 0
    %604 = vmatmul.mubr.bf16.gmra.mrb[0].mxu0 %v449
    %v605 = vpop.f32.mrb[0].mxu0
    %v606 = vadd.f32 %v566, %v605
    %v607 = vpop.f32.mrb[0].mxu0
    %v608 = vpop.f32.mrb[0].mxu0
    %v609 = vpop.f32.mrb[0].mxu0
    %610 = vdwg.mxu0
    %v611 = vmax.f32 %v606, 0.0
    %vm612 = vcmask 523264
    %v613 = vsel %vm612, %v611, 0.0
    %v614 = vrot.slane %v613, 4
    %v615 = vadd.f32 %v613, %v614
    %v616 = vrot.slane %v615, 2
    %v617 = vadd.f32 %v615, %v616
    %v618 = vrot.slane %v617, 1
    %v619 = vadd.f32 %v617, %v618
    %v620 = vrcp.pop 8.0
    %v621 = vmul.f32 %v619, %v620
    %v622 = vmul.f32 %v611, %v611
    %v623 = vsel %vm612, %v622, 0.0
    %v624 = vrot.slane %v623, 4
    %v625 = vadd.f32 %v623, %v624
    %v626 = vrot.slane %v625, 2
    %v627 = vadd.f32 %v625, %v626
    %v628 = vrot.slane %v627, 1
    %v629 = vadd.f32 %v627, %v628
    %v630 = vmul.f32 %v629, %v620
    %v631 = vmul.f32 %v621, %v621
    %v632 = vsub.f32 %v630, %v631
    %v633 = vmax.f32 %v632, 0.0
    %v634 = vld [vmem:[%s4 + $0x1] sm:$0x1]
    %v635 = vadd.f32 %v633, 1e-05
    %v636 = vrsqrt.pop %v635
    %v637 = vmul.f32 %v634, %v636
    %v638 = vld [vmem:[%s4 + $0x2] sm:$0x1]
    %v639 = vmul.f32 %v621, %v637
    %v640 = vsub.f32 %v638, %v639
    %v641 = vlaneseq
    %v642 = vshrl.u32 %v641, 7
    %v643 = vsub.s32 0, %v642
    %v644 = vrot.slane %v637, %v643
    %v645 = vmul.f32 %v611, %v644
    %v646 = vlaneseq
    %v647 = vshrl.u32 %v646, 7
    %v648 = vsub.s32 0, %v647
    %v649 = vrot.slane %v640, %v648
    %v650 = vadd.f32 %v645, %v649
    %v651 = vpack.c.bf16 %v650, %v650
    %v652 = vld [vmem:[%s2] sm:$0xf]
    %v653 = vld [vmem:[%s2 + $0x4] sm:$0xf]
    %v654 = vld [vmem:[%s2 + $0x8] sm:$0xf]
    %v655 = vld [vmem:[%s2 + $0xc] sm:$0xf]
    %v656 = vld [vmem:[%s2 + $0x10] sm:$0xf]
    %v657 = vld [vmem:[%s2 + $0x14] sm:$0xf]
    %v658 = vld [vmem:[%s2 + $0x18] sm:$0xf]
    %v659 = vld [vmem:[%s2 + $0x1c] sm:$0xf]
    %v660 = vld [vmem:[%s4 + $0x3] sm:$0x1]
    %v661 = vlaneseq
    %v662 = vshrl.u32 %v661, 7
    %v663 = vsub.s32 0, %v662
    %v664 = vrot.slane %v660, %v663
    %v673 = vunpack.c.l.b16 %v652
    %v674 = vunpack.c.l.b16 %v653
    %v675 = vunpack.c.l.b16 %v654
    %v676 = vunpack.c.l.b16 %v655
    %v677 = vunpack.c.l.b16 %v656
    %v678 = vunpack.c.l.b16 %v657
    %v679 = vunpack.c.l.b16 %v658
    %v680 = vunpack.c.l.b16 %v659
    %v681 = vpack.c.b16 %v674, %v673
    %v682 = vpack.c.b16 %v676, %v675
    %v683 = vpack.c.b16 %v678, %v677
    %v684 = vpack.c.b16 %v680, %v679
    %v690 = vsel %vm612, %v651, 0
    %692 = vmatprep.subr.bf16.mxu0 0
    %693 = vmatpush1.bf16.msra.mxu0 %v681
    %694 = vmatprep.subr.bf16.mxu0 0
    %695 = vmatpush1.bf16.msra.mxu0 %v682
    %696 = vmatprep.subr.bf16.mxu0 0
    %697 = vmatpush1.bf16.msra.mxu0 %v683
    %698 = vmatprep.subr.bf16.mxu0 0
    %699 = vmatpush1.bf16.msra.mxu0 %v684
    %700 = vmatprep.subr.bf16.mxu0 0
    %701 = vmatpush1.bf16.msra.mxu0 0
    %702 = vmatprep.subr.bf16.mxu0 0
    %703 = vmatpush1.bf16.msra.mxu0 0
    %704 = vmatprep.subr.bf16.mxu0 0
    %705 = vmatpush1.bf16.msra.mxu0 0
    %706 = vmatprep.subr.bf16.mxu0 0
    %707 = vmatpush1.bf16.msra.mxu0 0
    %708 = vmatprep.subr.bf16.mxu0 0
    %709 = vmatpush1.bf16.msra.mxu0 0
    %710 = vmatprep.subr.bf16.mxu0 0
    %711 = vmatpush1.bf16.msra.mxu0 0
    %712 = vmatprep.subr.bf16.mxu0 0
    %713 = vmatpush1.bf16.msra.mxu0 0
    %714 = vmatprep.subr.bf16.mxu0 0
    %715 = vmatpush1.bf16.msra.mxu0 0
    %716 = vmatprep.subr.bf16.mxu0 0
    %717 = vmatpush1.bf16.msra.mxu0 0
    %718 = vmatprep.subr.bf16.mxu0 0
    %719 = vmatpush1.bf16.msra.mxu0 0
    %720 = vmatprep.subr.bf16.mxu0 0
    %721 = vmatpush1.bf16.msra.mxu0 0
    %722 = vmatprep.subr.bf16.mxu0 0
    %723 = vmatpush1.bf16.msra.mxu0 0
    %724 = vmatprep.mubr.bf16.mxu0 0
    %725 = vmatmul.mubr.bf16.gmra.mrb[0].mxu0 %v690
    %v726 = vpop.f32.mrb[0].mxu0
    %v727 = vadd.f32 %v664, %v726
    %v728 = vpop.f32.mrb[0].mxu0
    %v729 = vpop.f32.mrb[0].mxu0
    %v730 = vpop.f32.mrb[0].mxu0
    %731 = vdwg.mxu0
    %v732 = vmax.f32 %v727, 0.0
    %vm733 = vcmask 261120
    %v734 = vsel %vm733, %v732, 0.0
    %v735 = vrot.slane %v734, 4
    %v736 = vadd.f32 %v734, %v735
    %v737 = vrot.slane %v736, 2
    %v738 = vadd.f32 %v736, %v737
    %v739 = vrot.slane %v738, 1
    %v740 = vadd.f32 %v738, %v739
    %v741 = vmul.f32 %v740, %v620
    %v742 = vmul.f32 %v732, %v732
    %v743 = vsel %vm733, %v742, 0.0
    %v744 = vrot.slane %v743, 4
    %v745 = vadd.f32 %v743, %v744
    %v746 = vrot.slane %v745, 2
    %v747 = vadd.f32 %v745, %v746
    %v748 = vrot.slane %v747, 1
    %v749 = vadd.f32 %v747, %v748
    %v750 = vmul.f32 %v749, %v620
    %v751 = vmul.f32 %v741, %v741
    %v752 = vsub.f32 %v750, %v751
    %v753 = vmax.f32 %v752, 0.0
    %v754 = vld [vmem:[%s4 + $0x4] sm:$0x1]
    %v755 = vadd.f32 %v753, 1e-05
    %v756 = vrsqrt.pop %v755
    %v757 = vmul.f32 %v754, %v756
    %v758 = vld [vmem:[%s4 + $0x5] sm:$0x1]
    %v759 = vmul.f32 %v741, %v757
    %v760 = vsub.f32 %v758, %v759
    %v761 = vlaneseq
    %v762 = vshrl.u32 %v761, 7
    %v763 = vsub.s32 0, %v762
    %v764 = vrot.slane %v757, %v763
    %v765 = vmul.f32 %v732, %v764
    %v766 = vlaneseq
    %v767 = vshrl.u32 %v766, 7
    %v768 = vsub.s32 0, %v767
    %v769 = vrot.slane %v760, %v768
    %v770 = vadd.f32 %v765, %v769
    %v771 = vpack.c.bf16 %v770, %v770
    %v772 = vld [vmem:[%s3] sm:$0xf]
    %v773 = vld [vmem:[%s3 + $0x4] sm:$0xf]
    %v774 = vld [vmem:[%s3 + $0x8] sm:$0xf]
    %v775 = vld [vmem:[%s3 + $0xc] sm:$0xf]
    %v776 = vld [vmem:[%s4 + $0x6] sm:$0x1]
    %v777 = vlaneseq
    %v778 = vshrl.u32 %v777, 7
    %v779 = vsub.s32 0, %v778
    %v780 = vrot.slane %v776, %v779
    %v785 = vunpack.c.l.b16 %v772
    %v786 = vunpack.c.l.b16 %v773
    %v787 = vunpack.c.l.b16 %v774
    %v788 = vunpack.c.l.b16 %v775
    %v789 = vpack.c.b16 %v786, %v785
    %v790 = vpack.c.b16 %v788, %v787
    %v794 = vsel %vm733, %v771, 0
    %796 = vmatprep.subr.bf16.mxu0 0
    %797 = vmatpush1.bf16.msra.mxu0 %v789
    %798 = vmatprep.subr.bf16.mxu0 0
    %799 = vmatpush1.bf16.msra.mxu0 %v790
    %800 = vmatprep.subr.bf16.mxu0 0
    %801 = vmatpush1.bf16.msra.mxu0 0
    %802 = vmatprep.subr.bf16.mxu0 0
    %803 = vmatpush1.bf16.msra.mxu0 0
    %804 = vmatprep.subr.bf16.mxu0 0
    %805 = vmatpush1.bf16.msra.mxu0 0
    %806 = vmatprep.subr.bf16.mxu0 0
    %807 = vmatpush1.bf16.msra.mxu0 0
    %808 = vmatprep.subr.bf16.mxu0 0
    %809 = vmatpush1.bf16.msra.mxu0 0
    %810 = vmatprep.subr.bf16.mxu0 0
    %811 = vmatpush1.bf16.msra.mxu0 0
    %812 = vmatprep.subr.bf16.mxu0 0
    %813 = vmatpush1.bf16.msra.mxu0 0
    %814 = vmatprep.subr.bf16.mxu0 0
    %815 = vmatpush1.bf16.msra.mxu0 0
    %816 = vmatprep.subr.bf16.mxu0 0
    %817 = vmatpush1.bf16.msra.mxu0 0
    %818 = vmatprep.subr.bf16.mxu0 0
    %819 = vmatpush1.bf16.msra.mxu0 0
    %820 = vmatprep.subr.bf16.mxu0 0
    %821 = vmatpush1.bf16.msra.mxu0 0
    %822 = vmatprep.subr.bf16.mxu0 0
    %823 = vmatpush1.bf16.msra.mxu0 0
    %824 = vmatprep.subr.bf16.mxu0 0
    %825 = vmatpush1.bf16.msra.mxu0 0
    %826 = vmatprep.subr.bf16.mxu0 0
    %827 = vmatpush1.bf16.msra.mxu0 0
    %828 = vmatprep.mubr.bf16.mxu0 0
    %829 = vmatmul.mubr.bf16.gmra.mrb[0].mxu0 %v794
    %v830 = vpop.f32.mrb[0].mxu0
    %v831 = vadd.f32 %v780, %v830
    %v832 = vpop.f32.mrb[0].mxu0
    %v833 = vpop.f32.mrb[0].mxu0
    %v834 = vpop.f32.mrb[0].mxu0
    %835 = vdwg.mxu0
    %v836 = vmax.f32 %v831, 0.0
    %v837 = vrot.slane %v836, 4
    %v838 = vadd.f32 %v836, %v837
    %v839 = vrot.slane %v838, 2
    %v840 = vadd.f32 %v838, %v839
    %v841 = vrot.slane %v840, 1
    %v842 = vadd.f32 %v840, %v841
    %v843 = vmul.f32 %v842, %v620
    %v844 = vmul.f32 %v836, %v836
    %v845 = vrot.slane %v844, 4
    %v846 = vadd.f32 %v844, %v845
    %v847 = vrot.slane %v846, 2
    %v848 = vadd.f32 %v846, %v847
    %v849 = vrot.slane %v848, 1
    %v850 = vadd.f32 %v848, %v849
    %v851 = vmul.f32 %v850, %v620
    %v852 = vmul.f32 %v843, %v843
    %v853 = vsub.f32 %v851, %v852
    %v854 = vmax.f32 %v853, 0.0
    %v855 = vld [vmem:[%s4 + $0x7] sm:$0x1]
    %v856 = vadd.f32 %v854, 1e-05
    %v857 = vrsqrt.pop %v856
    %v858 = vmul.f32 %v855, %v857
    %v859 = vld [vmem:[%s4 + $0x8] sm:$0x1]
    %v860 = vmul.f32 %v843, %v858
    %v861 = vsub.f32 %v859, %v860
    %v862 = vlaneseq
    %v863 = vshrl.u32 %v862, 7
    %v864 = vsub.s32 0, %v863
    %v865 = vrot.slane %v858, %v864
    %v866 = vmul.f32 %v836, %v865
    %v867 = vlaneseq
    %v868 = vshrl.u32 %v867, 7
    %v869 = vsub.s32 0, %v868
    %v870 = vrot.slane %v861, %v869
    %v871 = vadd.f32 %v866, %v870
    %v872 = vlaneseq
    %v873 = vand.u32 %v872, 127
    %vm874 = vcmp.lt.s32.totalorder %v873, 10
    %v875 = vsel %vm874, %v871, -1e+30
    %876 = vmax.xlane.f32.xlu0 %v875
    %v877 = vpop.xlane.xlu0 %876
    %v878 = vsub.f32 %v875, %v877
    %v879 = vmul.f32 %v878, 1.442695
    %v880 = vpow.pop %v879
    %881 = vadd.xlane.f32.xlu0 %v880
    %v882 = vpop.xlane.xlu0 %881
    %v883 = vrcp.pop %v882
    %v884 = vmul.f32 %v880, %v883
    %885 = vst [vmem:[#allocation2] sm:$0xff] %v884
    // Predicated region
    $region22: #{tpu_custom_call.1} parent=1 // pred_check
      _
    $region23: #{tpu_custom_call.1} parent=1 // pred_check_branch
      %887 = sbr.rel (0) target = $region25
    $region24: #{tpu_custom_call.1} parent=1 // pred_region
      %s889 = ssub.s32 128, 128
      %890 = vsyncadd [#allocation3], %s889
      %s892 = sshll.u32 [#allocation2], 4
      %s893 = int_to_ptr.vmem [resolvable:$true] %s892
      %895 = dma.vmem_to_hbm [thread:$0]  %s893, 128, %s5, [#allocation3]
    $region25: #{tpu_custom_call.1} parent=1 // pred_fallthru
      _
    // Predicated region
    $region26: #{tpu_custom_call.1} parent=1 // pred_check
      _
    $region27: #{tpu_custom_call.1} parent=1 // pred_check_branch
      %897 = sbr.rel (0) target = $region29
    $region28: #{tpu_custom_call.1} parent=1 // pred_region
      %898 = dma.done [#allocation3], 128
    $region29: #{tpu_custom_call.1} parent=1 // pred_fallthru
      _
    %899 = vsyncpa [#allocation3], 1

</llo_original>
